<compile_context>
chip_gen: v7x
topology: tpu7x:2x2x1
jax: 0.10.0
libtpu: 0.0.40
codegen_flags: <defaults>
</compile_context>

<pallas_src>
import functools

import jax
import jax.numpy as jnp
from jax.experimental import pallas as pl
from jax.experimental.pallas import tpu as pltpu


def _vmem_capacity_bytes() -> int:
    try:
        return int(pltpu.get_tpu_info().vmem_capacity_bytes)
    except Exception:
        return 64 * 1024 * 1024  # conservative fallback (v7x per-core VMEM)


def _choose_tiles(B, C, Lout, in_item, out_item, lane_tile, batch_tile):
    """Pick (batch_tile Bt, lane_tile TL) under a VMEM budget."""
    cap = _vmem_capacity_bytes()
    budget = max(8 << 20, int(0.4 * cap))      # bytes for double-buffered blocks
    col = 2 * C * in_item + C * out_item       # in+out bytes per output column per row

    if lane_tile is None and batch_tile is None:
        # Tiny problem: one grid step, whole arrays resident in VMEM.
        if B <= 16 and 2 * B * Lout * col <= min(budget, 16 << 20):
            return B, Lout

    # Length tile: as large as the budget allows (multiple of 128, lane-dense).
    if lane_tile is not None:
        TL = max(1, min(int(lane_tile), Lout))
    else:
        TL = min(Lout, max(1, budget // (2 * col)), 32768)
    if TL < Lout:
        TL = max(128, (TL // 128) * 128)
        if TL > Lout:
            TL = Lout

    # Fold batch rows into a step until each step moves ~2 MiB (or VMEM caps it).
    if batch_tile is not None:
        Bt = max(1, min(int(batch_tile), B, 64))
        while B % Bt:
            Bt -= 1
    else:
        Bt = 1
        step = TL * col
        while (Bt * 2 <= B and B % (Bt * 2) == 0 and Bt < 16
               and Bt * step < (2 << 20)
               and 2 * (Bt * 2) * step <= budget):
            Bt *= 2
    return Bt, TL


def _td_conv_kernel(x_ref, w_ref, b_ref, o_ref, *, precision):
    # x_ref: (Bt, 2C, TL)  packed taps; TL output positions on the 128-lane axis
    # w_ref: (C, 2C)       w_cat[co, d*C + ci] = torch_w[co, ci, d]   (resident)
    # b_ref: (C, 1)        float32 bias                               (resident)
    # o_ref: (Bt, C, TL)   lane-dense output stores
    w = w_ref[...]
    b = b_ref[...]
    for i in range(o_ref.shape[0]):            # Bt is small & static -> unrolled
        y = jnp.dot(w, x_ref[i], precision=precision,
                    preferred_element_type=jnp.float32)   # (C, TL) on the MXU
        o_ref[i] = (y + b).astype(o_ref.dtype)


def td_layer(x, w, b, *, compute_dtype=None, out_dtype=None,
             lane_tile=None, batch_tile=None, precision=None):
    """Conv1d(C, C, kernel_size=2, stride=2) forward (PyTorch semantics).

    x: (B, C, L)   activations (NCL, as in PyTorch)
    w: (C, C, 2)   PyTorch Conv1d weight [out_ch, in_ch, k]
    b: (C,)        bias
    returns: (B, C, L // 2) in out_dtype (default: x.dtype)

    compute_dtype: e.g. jnp.bfloat16 to halve HBM traffic (f32 accumulation).
    precision: e.g. jax.lax.Precision.HIGHEST for exact-ish f32 matmuls.
    """
    B, C, L = x.shape
    Lout = L // 2
    out_dtype = x.dtype if out_dtype is None else out_dtype

    xc = x if compute_dtype is None else x.astype(compute_dtype)
    wc = w if compute_dtype is None else w.astype(compute_dtype)

    # Pack the two taps of each output position along channels (one XLA pass):
    #   x_pairs[b, d*C + ci, l] = x[b, ci, 2*l + d]
    # TODO(synk): fold this de-interleave into the kernel once Mosaic supports
    # lane-strided loads; today this is the one remaining extra HBM pass.
    x_pairs = (xc[:, :, :2 * Lout]
               .reshape(B, C, Lout, 2)
               .transpose(0, 3, 1, 2)
               .reshape(B, 2 * C, Lout))
    # w_cat[co, d*C + ci] = w[co, ci, d]
    w_cat = jnp.transpose(wc, (0, 2, 1)).reshape(C, 2 * C)
    b_col = b.astype(jnp.float32).reshape(C, 1)

    in_item = jnp.dtype(x_pairs.dtype).itemsize
    out_item = jnp.dtype(out_dtype).itemsize
    Bt, TL = _choose_tiles(B, C, Lout, in_item, out_item, lane_tile, batch_tile)
    grid = (B // Bt, pl.cdiv(Lout, TL))

    # VMEM: double-buffered in/out blocks + resident weights, with headroom.
    cap = _vmem_capacity_bytes()
    need = (2 * Bt * TL * (2 * C * in_item + C * out_item)
            + 2 * (C * 2 * C * in_item) + 2 * C * 4 + (2 << 20))
    vmem_limit = int(min(int(0.95 * cap), max(need, 32 << 20)))

    kernel = functools.partial(_td_conv_kernel, precision=precision)
    return pl.pallas_call(
        kernel,
        out_shape=jax.ShapeDtypeStruct((B, C, Lout), out_dtype),
        grid_spec=pltpu.PrefetchScalarGridSpec(
            num_scalar_prefetch=0,
            grid=grid,
            in_specs=[
                pl.BlockSpec((Bt, 2 * C, TL), lambda bi, li: (bi, 0, li)),
                pl.BlockSpec((C, 2 * C), lambda bi, li: (0, 0)),
                pl.BlockSpec((C, 1), lambda bi, li: (0, 0)),
            ],
            out_specs=pl.BlockSpec((Bt, C, TL), lambda bi, li: (bi, 0, li)),
        ),
        compiler_params=pltpu.CompilerParams(
            dimension_semantics=("parallel", "parallel"),
            vmem_limit_bytes=vmem_limit),
    )(x_pairs, w_cat, b_col)


def td_layer_reference(x, w, b):
    # Pure-JAX reference of Conv1d(k=2, stride=2) cross-correlation.
    B, C, L = x.shape
    Lout = L // 2
    xp = x[:, :, :2 * Lout].reshape(B, C, Lout, 2)
    return jnp.einsum('bcld,ocd->bol', xp, w) + b[None, :, None]


if __name__ == "__main__":
    key = jax.random.PRNGKey(0)
    kx, kw, kb, kx2, kw2, kb2 = jax.random.split(key, 6)

    # Small shapes implied by the module: batch=2, in_channel=4, length=16.
    B, C, L = 2, 4, 16
    x = jax.random.normal(kx, (B, C, L), jnp.float32)
    w = 0.1 * jax.random.normal(kw, (C, C, 2), jnp.float32)
    b = 0.1 * jax.random.normal(kb, (C,), jnp.float32)

    out = jax.jit(td_layer)(x, w, b)
    jax.block_until_ready(out)
    assert out.shape == (B, C, L // 2), out.shape
    ref = td_layer_reference(x, w, b)
    assert jnp.allclose(out, ref, atol=1e-3, rtol=1e-3), \
        float(jnp.max(jnp.abs(out - ref)))

    # Multi-tile pipelined path (forced small lane tile -> grid > 1) with
    # batch folding into a single grid step.
    B2, C2, L2 = 2, 8, 4096
    x2 = jax.random.normal(kx2, (B2, C2, L2), jnp.float32)
    w2 = 0.1 * jax.random.normal(kw2, (C2, C2, 2), jnp.float32)
    b2 = 0.1 * jax.random.normal(kb2, (C2,), jnp.float32)
    tiled = jax.jit(functools.partial(td_layer, lane_tile=512))
    out2 = tiled(x2, w2, b2)
    jax.block_until_ready(out2)
    assert out2.shape == (B2, C2, L2 // 2), out2.shape
    ref2 = td_layer_reference(x2, w2, b2)
    assert jnp.allclose(out2, ref2, atol=1e-3, rtol=1e-3), \
        float(jnp.max(jnp.abs(out2 - ref2)))

    # bf16 compute path (f32 accumulation on the MXU), looser tolerance.
    bf16 = jax.jit(functools.partial(td_layer, compute_dtype=jnp.bfloat16))
    out3 = bf16(x2, w2, b2)
    jax.block_until_ready(out3)
    assert out3.shape == (B2, C2, L2 // 2), out3.shape
    assert jnp.allclose(out3, ref2, atol=2e-2, rtol=2e-2), \
        float(jnp.max(jnp.abs(out3 - ref2)))

    print("KERNEL_OK")
</pallas_src>

<mosaic_0001>
module attributes {stable_mosaic.version = 11 : i64} {
  func.func @_td_conv_kernel(%arg0: i32, %arg1: i32, %arg2: memref<2x8x8xf32, #tpu.memory_space<vmem>>, %arg3: memref<4x8xf32, #tpu.memory_space<vmem>>, %arg4: memref<4x1xf32, #tpu.memory_space<vmem>>, %arg5: memref<2x4x8xf32, #tpu.memory_space<vmem>>) attributes {dimension_semantics = [#tpu.dimension_semantics<parallel>, #tpu.dimension_semantics<parallel>], iteration_bounds = array<i64: 1, 1>, scalar_prefetch = 0 : i64, scratch_operands = 0 : i64, tpu.core_type = #tpu.core_type<tc>, window_params = [{transform_indices = @transform_0, window_bounds = array<i64: 2, 8, 8>}, {pipeline_mode = #tpu.pipeline_mode<synchronous>, transform_indices = @transform_1, window_bounds = array<i64: 4, 8>}, {pipeline_mode = #tpu.pipeline_mode<synchronous>, transform_indices = @transform_2, window_bounds = array<i64: 4, 1>}, {transform_indices = @transform_3, window_bounds = array<i64: 2, 4, 8>}]} {
    %c0 = arith.constant 0 : index
    %c0_0 = arith.constant 0 : index
    %0 = vector.load %arg3[%c0, %c0_0] : memref<4x8xf32, #tpu.memory_space<vmem>>, vector<4x8xf32>
    %c0_1 = arith.constant 0 : index
    %c0_2 = arith.constant 0 : index
    %1 = vector.load %arg4[%c0_1, %c0_2] : memref<4x1xf32, #tpu.memory_space<vmem>>, vector<4x1xf32>
    %c0_3 = arith.constant 0 : index
    %c0_4 = arith.constant 0 : index
    %c0_5 = arith.constant 0 : index
    %2 = vector.load %arg2[%c0_3, %c0_4, %c0_5] : memref<2x8x8xf32, #tpu.memory_space<vmem>>, vector<1x8x8xf32>
    %3 = vector.shape_cast %2 : vector<1x8x8xf32> to vector<8x8xf32>
    %cst = arith.constant dense<0.000000e+00> : vector<4x8xf32>
    %4 = tpu.matmul %0, %3, %cst {dimension_numbers = #tpu.dot_dimension_numbers<[1], [0], [0], [1], [0, 0, 1, 1], [], []>} : vector<4x8xf32>, vector<8x8xf32>, vector<4x8xf32> -> vector<4x8xf32>
    %5 = vector.broadcast %1 : vector<4x1xf32> to vector<4x8xf32>
    %6 = arith.addf %4, %5 : vector<4x8xf32>
    %c0_6 = arith.constant 0 : index
    %c0_7 = arith.constant 0 : index
    %c0_8 = arith.constant 0 : index
    %7 = vector.load %arg5[%c0_6, %c0_7, %c0_8] : memref<2x4x8xf32, #tpu.memory_space<vmem>>, vector<1x4x8xf32>
    %8 = vector.shape_cast %7 : vector<1x4x8xf32> to vector<4x8xf32>
    %9 = vector.shape_cast %6 : vector<4x8xf32> to vector<1x4x8xf32>
    tpu.vector_store %arg5[%c0_6, %c0_7, %c0_8], %9 {strides = array<i32>} : memref<2x4x8xf32, #tpu.memory_space<vmem>>, vector<1x4x8xf32>,
    %c1 = arith.constant 1 : index
    %c0_9 = arith.constant 0 : index
    %c0_10 = arith.constant 0 : index
    %10 = vector.load %arg2[%c1, %c0_9, %c0_10] : memref<2x8x8xf32, #tpu.memory_space<vmem>>, vector<1x8x8xf32>
    %11 = vector.shape_cast %10 : vector<1x8x8xf32> to vector<8x8xf32>
    %cst_11 = arith.constant dense<0.000000e+00> : vector<4x8xf32>
    %12 = tpu.matmul %0, %11, %cst_11 {dimension_numbers = #tpu.dot_dimension_numbers<[1], [0], [0], [1], [0, 0, 1, 1], [], []>} : vector<4x8xf32>, vector<8x8xf32>, vector<4x8xf32> -> vector<4x8xf32>
    %13 = vector.broadcast %1 : vector<4x1xf32> to vector<4x8xf32>
    %14 = arith.addf %12, %13 : vector<4x8xf32>
    %c1_12 = arith.constant 1 : index
    %c0_13 = arith.constant 0 : index
    %c0_14 = arith.constant 0 : index
    %15 = vector.load %arg5[%c1_12, %c0_13, %c0_14] : memref<2x4x8xf32, #tpu.memory_space<vmem>>, vector<1x4x8xf32>
    %16 = vector.shape_cast %15 : vector<1x4x8xf32> to vector<4x8xf32>
    %17 = vector.shape_cast %14 : vector<4x8xf32> to vector<1x4x8xf32>
    tpu.vector_store %arg5[%c1_12, %c0_13, %c0_14], %17 {strides = array<i32>} : memref<2x4x8xf32, #tpu.memory_space<vmem>>, vector<1x4x8xf32>,
    return
  }
  func.func @transform_0(%arg0: i32, %arg1: i32) -> (i32, i32, i32) {
    %c0_i32 = arith.constant 0 : i32
    %c0_i32_0 = arith.constant 0 : i32
    return %arg0, %c0_i32, %arg1 : i32, i32, i32
  }
  func.func @transform_1(%arg0: i32, %arg1: i32) -> (i32, i32) {
    %c0_i32 = arith.constant 0 : i32
    %c0_i32_0 = arith.constant 0 : i32
    %c0_i32_1 = arith.constant 0 : i32
    return %c0_i32, %c0_i32_0 : i32, i32
  }
  func.func @transform_2(%arg0: i32, %arg1: i32) -> (i32, i32) {
    %c0_i32 = arith.constant 0 : i32
    %c0_i32_0 = arith.constant 0 : i32
    %c0_i32_1 = arith.constant 0 : i32
    return %c0_i32, %c0_i32_0 : i32, i32
  }
  func.func @transform_3(%arg0: i32, %arg1: i32) -> (i32, i32, i32) {
    %c0_i32 = arith.constant 0 : i32
    %c0_i32_0 = arith.constant 0 : i32
    return %arg0, %c0_i32, %arg1 : i32, i32, i32
  }
}

</mosaic_0001>

<llo_original>
// kernel: td_layer.1
$region0: #{td_layer.1}
  #allocation0 [shape = 'u32[]', space=smem, size = 0x4, offset = 0x4, fixed_abs, tag = 'smem constant byte address 0x4 - core index']
  #allocation1 [shape = 'u32[144,128]{1,0:T(1,128)}', space=vmem, size = 0x12000, scoped, tag = 'internal scratch']
  %s0 = inlined_call_operand.vmem [shape: f32[2,8,8], index: 0, kind: input, shape index: {}]
  %s1 = inlined_call_operand.vmem [shape: f32[4,8], index: 1, kind: input, shape index: {}]
  %s2 = inlined_call_operand.vmem [shape: f32[4,1], index: 2, kind: input, shape index: {}]
  %s3 = inlined_call_operand.hbm [shape: f32[2,4,8], index: 3, kind: output, shape index: {}]
  %s4 = sld [smem:[#allocation0]]
  $region22: #{td_layer.1} parent=0
    _
  %s6 = ssub.s32 1, %s4
  %s7 = scalar_select 0, %s6, %s4
  $region1: #{td_layer.1} parent=0
    #allocation2 [shape = 'u8[4096]{0}', space=vmem, size = 0x1000, scoped, tag = 'output window, operand 0, single buffered']
    #allocation3 [shape = 's32[1]{0}', space=sflag, size = 0x4, scoped, tag = 'scoped memory for td_layer.1']
    %8 = vsyncpa [#allocation3], 0
    // Predicated region
    $region2: #{td_layer.1} parent=1 // pred_check
      _
    $region3: #{td_layer.1} parent=1 // pred_check_branch
      %10 = sbr.rel (0) target = $region5
    $region4: #{td_layer.1} parent=1 // pred_region
      _
    $region5: #{td_layer.1} parent=1 // pred_fallthru
      _
    // Predicated region
    $region6: #{td_layer.1} parent=1 // pred_check
      _
    $region7: #{td_layer.1} parent=1 // pred_check_branch
      %12 = sbr.rel (0) target = $region9
    $region8: #{td_layer.1} parent=1 // pred_region
      _
    $region9: #{td_layer.1} parent=1 // pred_fallthru
      _
    // Predicated region
    $region10: #{td_layer.1} parent=1 // pred_check
      _
    $region11: #{td_layer.1} parent=1 // pred_check_branch
      %14 = sbr.rel (0) target = $region13
    $region12: #{td_layer.1} parent=1 // pred_region
      _
    $region13: #{td_layer.1} parent=1 // pred_fallthru
      _
    %v15 = vld [vmem:[%s1] sm:$0xf]
    %v16 = vld [vmem:[%s2] sm:$0xf]
    %v17 = vld [vmem:[%s0] sm:$0xff]
    %19 = vset.pattern.permute.xlu0 0
    %20 = vperm.xlu0 %19, %v16
    %v21 = vpop.permute.xlu0 %20
    %vm23 = vcmask 64512
    %v25 = vsel %vm23, %v15, 0
    %27 = vmatprep.subr.mxu0 0.0
    %28 = vmatpush1.msra.mxu0 %v17
    %29 = vmatprep.subr.mxu0 0.0
    %30 = vmatpush1.msra.mxu0 0.0
    %31 = vmatprep.subr.mxu0 0.0
    %32 = vmatpush1.msra.mxu0 0.0
    %33 = vmatprep.subr.mxu0 0.0
    %34 = vmatpush1.msra.mxu0 0.0
    %35 = vmatprep.subr.mxu0 0.0
    %36 = vmatpush1.msra.mxu0 0.0
    %37 = vmatprep.subr.mxu0 0.0
    %38 = vmatpush1.msra.mxu0 0.0
    %39 = vmatprep.subr.mxu0 0.0
    %40 = vmatpush1.msra.mxu0 0.0
    %41 = vmatprep.subr.mxu0 0.0
    %42 = vmatpush1.msra.mxu0 0.0
    %43 = vmatprep.subr.mxu0 0.0
    %44 = vmatpush1.msra.mxu0 0.0
    %45 = vmatprep.subr.mxu0 0.0
    %46 = vmatpush1.msra.mxu0 0.0
    %47 = vmatprep.subr.mxu0 0.0
    %48 = vmatpush1.msra.mxu0 0.0
    %49 = vmatprep.subr.mxu0 0.0
    %50 = vmatpush1.msra.mxu0 0.0
    %51 = vmatprep.subr.mxu0 0.0
    %52 = vmatpush1.msra.mxu0 0.0
    %53 = vmatprep.subr.mxu0 0.0
    %54 = vmatpush1.msra.mxu0 0.0
    %55 = vmatprep.subr.mxu0 0.0
    %56 = vmatpush1.msra.mxu0 0.0
    %57 = vmatprep.subr.mxu0 0.0
    %58 = vmatpush1.msra.mxu0 0.0
    %59 = vmatprep.subr.mxu0 0.0
    %60 = vmatpush1.msra.mxu0 0.0
    %61 = vmatprep.subr.mxu0 0.0
    %62 = vmatpush1.msra.mxu0 0.0
    %63 = vmatprep.subr.mxu0 0.0
    %64 = vmatpush1.msra.mxu0 0.0
    %65 = vmatprep.subr.mxu0 0.0
    %66 = vmatpush1.msra.mxu0 0.0
    %67 = vmatprep.subr.mxu0 0.0
    %68 = vmatpush1.msra.mxu0 0.0
    %69 = vmatprep.subr.mxu0 0.0
    %70 = vmatpush1.msra.mxu0 0.0
    %71 = vmatprep.subr.mxu0 0.0
    %72 = vmatpush1.msra.mxu0 0.0
    %73 = vmatprep.subr.mxu0 0.0
    %74 = vmatpush1.msra.mxu0 0.0
    %75 = vmatprep.subr.mxu0 0.0
    %76 = vmatpush1.msra.mxu0 0.0
    %77 = vmatprep.subr.mxu0 0.0
    %78 = vmatpush1.msra.mxu0 0.0
    %79 = vmatprep.subr.mxu0 0.0
    %80 = vmatpush1.msra.mxu0 0.0
    %81 = vmatprep.subr.mxu0 0.0
    %82 = vmatpush1.msra.mxu0 0.0
    %83 = vmatprep.subr.mxu0 0.0
    %84 = vmatpush1.msra.mxu0 0.0
    %85 = vmatprep.subr.mxu0 0.0
    %86 = vmatpush1.msra.mxu0 0.0
    %87 = vmatprep.subr.mxu0 0.0
    %88 = vmatpush1.msra.mxu0 0.0
    %89 = vmatprep.subr.mxu0 0.0
    %90 = vmatpush1.msra.mxu0 0.0
    %91 = vmatprep.mubr.f32.mxu0 0.0
    %92 = vmatmul.mubr.f32.gmra.mrb[0].mxu0 %v25
    %v93 = vpop.f32.mrb[0].mxu0
    %v94 = vadd.f32 %v21, %v93
    %v95 = vpop.f32.mrb[0].mxu0
    %96 = vdwg.mxu0
    %vm97 = vcmask 60416
    %98 = vst.msk [vmem:[#allocation2] sm:$0xf] %vm97, %v94
    %s99 = scalar_lea.vmem %s0, 8
    %v100 = vld [vmem:[%s99] sm:$0xff]
    %101 = vmatprep.subr.mxu0 0.0
    %102 = vmatpush1.msra.mxu0 %v100
    %103 = vmatprep.subr.mxu0 0.0
    %104 = vmatpush1.msra.mxu0 0.0
    %105 = vmatprep.subr.mxu0 0.0
    %106 = vmatpush1.msra.mxu0 0.0
    %107 = vmatprep.subr.mxu0 0.0
    %108 = vmatpush1.msra.mxu0 0.0
    %109 = vmatprep.subr.mxu0 0.0
    %110 = vmatpush1.msra.mxu0 0.0
    %111 = vmatprep.subr.mxu0 0.0
    %112 = vmatpush1.msra.mxu0 0.0
    %113 = vmatprep.subr.mxu0 0.0
    %114 = vmatpush1.msra.mxu0 0.0
    %115 = vmatprep.subr.mxu0 0.0
    %116 = vmatpush1.msra.mxu0 0.0
    %117 = vmatprep.subr.mxu0 0.0
    %118 = vmatpush1.msra.mxu0 0.0
    %119 = vmatprep.subr.mxu0 0.0
    %120 = vmatpush1.msra.mxu0 0.0
    %121 = vmatprep.subr.mxu0 0.0
    %122 = vmatpush1.msra.mxu0 0.0
    %123 = vmatprep.subr.mxu0 0.0
    %124 = vmatpush1.msra.mxu0 0.0
    %125 = vmatprep.subr.mxu0 0.0
    %126 = vmatpush1.msra.mxu0 0.0
    %127 = vmatprep.subr.mxu0 0.0
    %128 = vmatpush1.msra.mxu0 0.0
    %129 = vmatprep.subr.mxu0 0.0
    %130 = vmatpush1.msra.mxu0 0.0
    %131 = vmatprep.subr.mxu0 0.0
    %132 = vmatpush1.msra.mxu0 0.0
    %133 = vmatprep.subr.mxu0 0.0
    %134 = vmatpush1.msra.mxu0 0.0
    %135 = vmatprep.subr.mxu0 0.0
    %136 = vmatpush1.msra.mxu0 0.0
    %137 = vmatprep.subr.mxu0 0.0
    %138 = vmatpush1.msra.mxu0 0.0
    %139 = vmatprep.subr.mxu0 0.0
    %140 = vmatpush1.msra.mxu0 0.0
    %141 = vmatprep.subr.mxu0 0.0
    %142 = vmatpush1.msra.mxu0 0.0
    %143 = vmatprep.subr.mxu0 0.0
    %144 = vmatpush1.msra.mxu0 0.0
    %145 = vmatprep.subr.mxu0 0.0
    %146 = vmatpush1.msra.mxu0 0.0
    %147 = vmatprep.subr.mxu0 0.0
    %148 = vmatpush1.msra.mxu0 0.0
    %149 = vmatprep.subr.mxu0 0.0
    %150 = vmatpush1.msra.mxu0 0.0
    %151 = vmatprep.subr.mxu0 0.0
    %152 = vmatpush1.msra.mxu0 0.0
    %153 = vmatprep.subr.mxu0 0.0
    %154 = vmatpush1.msra.mxu0 0.0
    %155 = vmatprep.subr.mxu0 0.0
    %156 = vmatpush1.msra.mxu0 0.0
    %157 = vmatprep.subr.mxu0 0.0
    %158 = vmatpush1.msra.mxu0 0.0
    %159 = vmatprep.subr.mxu0 0.0
    %160 = vmatpush1.msra.mxu0 0.0
    %161 = vmatprep.subr.mxu0 0.0
    %162 = vmatpush1.msra.mxu0 0.0
    %163 = vmatprep.subr.mxu0 0.0
    %164 = vmatpush1.msra.mxu0 0.0
    %165 = vmatprep.mubr.f32.mxu0 0.0
    %166 = vmatmul.mubr.f32.gmra.mrb[0].mxu0 %v25
    %v167 = vpop.f32.mrb[0].mxu0
    %v168 = vadd.f32 %v21, %v167
    %v169 = vpop.f32.mrb[0].mxu0
    %170 = vdwg.mxu0
    %s171 = scalar_lea.vmem [#allocation2], 4
    %172 = vst.msk [vmem:[%s171] sm:$0xf] %vm97, %v168
    // Predicated region
    $region14: #{td_layer.1} parent=1 // pred_check
      _
    $region15: #{td_layer.1} parent=1 // pred_check_branch
      %174 = sbr.rel (0) target = $region17
    $region16: #{td_layer.1} parent=1 // pred_region
      %s176 = ssub.s32 128, 128
      %177 = vsyncadd [#allocation3], %s176
      %s178 = sshll.u32 [#allocation2], 4
      %s179 = int_to_ptr.vmem [resolvable:$true] %s178
      %184 = dma.vmem_to_hbm [thread:$0]  %s179, 128, %s3, [#allocation3], 64, 64, 4
    $region17: #{td_layer.1} parent=1 // pred_fallthru
      _
    // Predicated region
    $region18: #{td_layer.1} parent=1 // pred_check
      _
    $region19: #{td_layer.1} parent=1 // pred_check_branch
      %186 = sbr.rel (0) target = $region21
    $region20: #{td_layer.1} parent=1 // pred_region
      %187 = dma.done [#allocation3], 128
    $region21: #{td_layer.1} parent=1 // pred_fallthru
      _
    %188 = vsyncpa [#allocation3], 1

</llo_original>
